<compile_context>
chip_gen: v7x
topology: tpu7x:2x2x1
jax: 0.10.0
libtpu: 0.0.40
codegen_flags: <defaults>
</compile_context>

<pallas_src>
import functools

import jax
import jax.numpy as jnp
from jax.experimental import pallas as pl
from jax.experimental.pallas import tpu as pltpu


VMEM_LIMIT_BYTES = 32 * 1024 * 1024   # raise v5e's 16 MiB default; == v6e/v7x default
VPU_ACC_BYTES = 64 * 1024             # cap live (cout, chunk) accumulator at ~16 vregs


def _round_up(a, b):
    return ((a + b - 1) // b) * b


@functools.lru_cache(maxsize=None)
def _block_bytes_target():
    """Target ~1-2 MiB per array per grid step, scaled by physical VMEM."""
    cap = 128 * 1024 * 1024
    try:
        cap = int(pltpu.get_tpu_info().vmem_capacity_bytes)
    except Exception:
        pass
    # 3 arrays x 2 buffers x block must sit comfortably inside the scoped limit.
    return max(512 * 1024, min(2 * 1024 * 1024, cap // 32))


# ---------------------------- kernels ---------------------------------------

def _residual_conv_mxu_kernel(x_ref, w_ref, shift_ref, y_ref, o_ref):
    # x_ref: (Cin, T), w_ref: (Cout, Cin) with BN scale pre-folded,
    # shift_ref: (Cout, 1), y_ref/o_ref: (Cout, T)
    acc = jnp.dot(w_ref[...], x_ref[...], preferred_element_type=jnp.float32)
    acc = acc + shift_ref[...]
    o_ref[...] = jnp.maximum(acc + y_ref[...], 0.0).astype(o_ref.dtype)


def _residual_conv_vpu_kernel(x_ref, w_ref, shift_ref, y_ref, o_ref, *, chunk):
    # Tiny Cin: drive the VPU with broadcast FMAs (outer-product style).
    # The lane axis is processed in `chunk`-wide pieces so the live
    # accumulator never exceeds ~16 vregs (no spill-to-VMEM loop).
    cin, t = x_ref.shape
    w = w_ref[...]          # (Cout, Cin)  -- tiny
    shift = shift_ref[...]  # (Cout, 1)
    for s in range(0, t, chunk):
        width = min(chunk, t - s)
        xs = x_ref[:, s:s + width]
        acc = shift + w[:, 0:1] * xs[0:1, :]
        for ci in range(1, cin):
            acc = acc + w[:, ci:ci + 1] * xs[ci:ci + 1, :]
        o_ref[:, s:s + width] = jnp.maximum(
            acc + y_ref[:, s:s + width], 0.0).astype(o_ref.dtype)


def _residual_add_kernel(x_ref, y_ref, o_ref):
    o_ref[...] = jnp.maximum(x_ref[...] + y_ref[...], 0.0).astype(o_ref.dtype)


# ---------------------------- module ----------------------------------------

class ResidualPallas:
    """Pallas port of U_CapsNets.U_CapsNet.Residual (forward pass only)."""

    def __init__(self, in_channel, out_channel, key, eps=1e-5):
        self.in_channel = in_channel
        self.out_channel = out_channel

        k_w, k_b, k_g, k_beta = jax.random.split(key, 4)
        # Conv2d(in, out, kernel_size=1) weight: (out, in, 1, 1) -> (out, in)
        bound = 1.0 / (in_channel ** 0.5)
        self.conv_w = jax.random.uniform(
            k_w, (out_channel, in_channel), jnp.float32, -bound, bound)
        self.conv_b = jax.random.uniform(
            k_b, (out_channel,), jnp.float32, -bound, bound)
        # BatchNorm2d params (deterministic synthetic values, eval mode)
        self.bn_gamma = 1.0 + 0.1 * jax.random.normal(k_g, (out_channel,), jnp.float32)
        self.bn_beta = 0.1 * jax.random.normal(k_beta, (out_channel,), jnp.float32)
        self.bn_mean = jnp.zeros((out_channel,), jnp.float32)
        self.bn_var = jnp.ones((out_channel,), jnp.float32)
        self.eps = eps

    # ---- channel-mismatch path: fused 1x1 conv + BN + add + ReLU ----------
    def _conv_path(self, x, y):
        N, cin, H, W = x.shape
        cout = self.out_channel
        HW = H * W

        # NCHW-native: pure reshapes, no transposes, no padding.
        x3 = x.reshape(N, cin, HW)
        y3 = y.reshape(N, cout, HW)

        # Fold BN (eval) into the conv: scaled weight + per-channel shift.
        scale = self.bn_gamma / jnp.sqrt(self.bn_var + self.eps)        # (Cout,)
        w_scaled = self.conv_w * scale[:, None]                         # (Cout, Cin)
        shift2 = ((self.conv_b - self.bn_mean) * scale
                  + self.bn_beta).reshape(cout, 1)                      # (Cout, 1)

        # Adaptive lane tile: (cin + 2*cout) * t * 4 bytes ~= block target.
        target = _block_bytes_target()
        per_lane_bytes = (cin + 2 * cout) * 4
        if HW <= 128:
            t = HW                                   # full lane extent (tiny image)
        else:
            t_cap = max(128, (target // per_lane_bytes) // 128 * 128)
            t = min(t_cap, (HW // 128) * 128)
            if N == 1 and pl.cdiv(HW, t) < 2:
                # keep >=2 parallel grid steps so both v7x TensorCores work
                t = max(128, _round_up(pl.cdiv(HW, 2), 128))
                t = min(t, (HW // 128) * 128)
        n_chunks = pl.cdiv(HW, t)                    # last block may be partial

        use_vpu = cin <= 8
        if use_vpu:
            chunk = max(128, min(1024, (VPU_ACC_BYTES // (cout * 4)) // 128 * 128))
            kernel = functools.partial(_residual_conv_vpu_kernel, chunk=chunk)
        else:
            kernel = _residual_conv_mxu_kernel

        out3 = pl.pallas_call(
            kernel,
            out_shape=jax.ShapeDtypeStruct((N, cout, HW), jnp.float32),
            grid=(N, n_chunks),
            in_specs=[
                pl.BlockSpec((None, cin, t), lambda n, s: (n, 0, s)),
                pl.BlockSpec((cout, cin), lambda n, s: (0, 0)),
                pl.BlockSpec((cout, 1), lambda n, s: (0, 0)),
                pl.BlockSpec((None, cout, t), lambda n, s: (n, 0, s)),
            ],
            out_specs=pl.BlockSpec((None, cout, t), lambda n, s: (n, 0, s)),
            compiler_params=pltpu.CompilerParams(
                dimension_semantics=("parallel", "parallel"),
                vmem_limit_bytes=VMEM_LIMIT_BYTES),
        )(x3, w_scaled, shift2, y3)

        return out3.reshape(N, cout, H, W)

    # ---- equal-channel path: add + ReLU on a flat lane-dense slab ---------
    def _add_path(self, x, y):
        total = x.size
        if total % 128 == 0:
            # zero-cost view with an exactly-128 lane axis: no pad, unmasked vst
            L = 128
            R = total // 128
        else:
            # rare fallback: keep the trailing W axis on lanes (block last dim
            # equals the full array dim). Masked stores, but still zero copies.
            L = x.shape[-1]
            R = total // L
        x2 = x.reshape(R, L)
        y2 = y.reshape(R, L)

        target = _block_bytes_target()
        if R <= 8:
            tr = R
        else:
            tr_cap = max(8, (target // (L * 4)) // 8 * 8)
            tr = min(tr_cap, (R // 8) * 8)
            if pl.cdiv(R, tr) < 2:
                # keep >=2 parallel grid steps so both v7x TensorCores work
                tr = max(8, _round_up(pl.cdiv(R, 2), 8))
        grid = (pl.cdiv(R, tr),)                     # last block may be partial

        out2 = pl.pallas_call(
            _residual_add_kernel,
            out_shape=jax.ShapeDtypeStruct((R, L), x.dtype),
            grid=grid,
            in_specs=[
                pl.BlockSpec((tr, L), lambda i: (i, 0)),
                pl.BlockSpec((tr, L), lambda i: (i, 0)),
            ],
            out_specs=pl.BlockSpec((tr, L), lambda i: (i, 0)),
            compiler_params=pltpu.CompilerParams(
                dimension_semantics=("parallel",),
                vmem_limit_bytes=VMEM_LIMIT_BYTES),
        )(x2, y2)

        return out2.reshape(x.shape)

    def __call__(self, x, y):
        # x: (N, Cin, H, W), y: (N, Cout, H, W)   (NCHW, like PyTorch)
        assert x.shape[1] == self.in_channel, "Residual function: dimension error x"
        assert y.shape[1] == self.out_channel, "Residual function: dimension error y"
        if self.in_channel != self.out_channel:
            return self._conv_path(x, y)
        return self._add_path(x, y)


def _reference(mod: ResidualPallas, x, y):
    """Pure-JAX reference for correctness check."""
    if mod.in_channel != mod.out_channel:
        xc = jnp.einsum("nchw,oc->nohw", x, mod.conv_w) + mod.conv_b[None, :, None, None]
        scale = mod.bn_gamma / jnp.sqrt(mod.bn_var + mod.eps)
        xc = (xc - mod.bn_mean[None, :, None, None]) * scale[None, :, None, None] \
             + mod.bn_beta[None, :, None, None]
    else:
        xc = x
    return jnp.maximum(xc + y, 0.0)


if __name__ == "__main__":
    key = jax.random.PRNGKey(0)
    k1, k2, kx, ky, kx2, ky2 = jax.random.split(key, 6)

    N, H, W = 2, 16, 16
    in_channel, out_channel = 4, 8

    # Path 1: channel mismatch -> fused 1x1 conv + BN + add + ReLU (VPU path)
    mod = ResidualPallas(in_channel, out_channel, k1)
    x = jax.random.normal(kx, (N, in_channel, H, W), jnp.float32)
    y = jax.random.normal(ky, (N, out_channel, H, W), jnp.float32)
    out = jax.block_until_ready(jax.jit(mod)(x, y))
    ref = _reference(mod, x, y)
    assert out.shape == (N, out_channel, H, W)
    assert jnp.allclose(out, ref, atol=1e-4, rtol=1e-4), "conv path mismatch vs reference"

    # Path 1b: channel mismatch with Cin > 8 -> MXU path
    modm = ResidualPallas(16, out_channel, k2)
    xm = jax.random.normal(kx, (N, 16, H, W), jnp.float32)
    outm = jax.block_until_ready(jax.jit(modm)(xm, y))
    refm = _reference(modm, xm, y)
    assert jnp.allclose(outm, refm, atol=1e-4, rtol=1e-4), "mxu path mismatch vs reference"

    # Path 2: equal channels -> add + ReLU only
    mod2 = ResidualPallas(out_channel, out_channel, k2)
    x2 = jax.random.normal(kx2, (N, out_channel, H, W), jnp.float32)
    y2 = jax.random.normal(ky2, (N, out_channel, H, W), jnp.float32)
    out2 = jax.block_until_ready(jax.jit(mod2)(x2, y2))
    ref2 = _reference(mod2, x2, y2)
    assert jnp.allclose(out2, ref2, atol=1e-5, rtol=1e-5), "add path mismatch vs reference"

    print("KERNEL_OK")
</pallas_src>

<mosaic_0001>
module attributes {stable_mosaic.version = 11 : i64} {
  func.func @_residual_conv_vpu_kernel(%arg0: i32, %arg1: i32, %arg2: memref<1x4x256xf32, #tpu.memory_space<vmem>>, %arg3: memref<8x4xf32, #tpu.memory_space<vmem>>, %arg4: memref<8x1xf32, #tpu.memory_space<vmem>>, %arg5: memref<1x8x256xf32, #tpu.memory_space<vmem>>, %arg6: memref<1x8x256xf32, #tpu.memory_space<vmem>>) attributes {dimension_semantics = [#tpu.dimension_semantics<parallel>, #tpu.dimension_semantics<parallel>], iteration_bounds = array<i64: 2, 1>, scalar_prefetch = 0 : i64, scratch_operands = 0 : i64, tpu.core_type = #tpu.core_type<tc>, window_params = [{transform_indices = @transform_0, window_bounds = array<i64: 1, 4, 256>}, {pipeline_mode = #tpu.pipeline_mode<synchronous>, transform_indices = @transform_1, window_bounds = array<i64: 8, 4>}, {pipeline_mode = #tpu.pipeline_mode<synchronous>, transform_indices = @transform_2, window_bounds = array<i64: 8, 1>}, {transform_indices = @transform_3, window_bounds = array<i64: 1, 8, 256>}, {transform_indices = @transform_4, window_bounds = array<i64: 1, 8, 256>}]} {
    %c0 = arith.constant 0 : index
    %c0_0 = arith.constant 0 : index
    %0 = vector.load %arg3[%c0, %c0_0] : memref<8x4xf32, #tpu.memory_space<vmem>>, vector<8x4xf32>
    %c0_1 = arith.constant 0 : index
    %c0_2 = arith.constant 0 : index
    %1 = vector.load %arg4[%c0_1, %c0_2] : memref<8x1xf32, #tpu.memory_space<vmem>>, vector<8x1xf32>
    %c0_3 = arith.constant 0 : index
    %c0_4 = arith.constant 0 : index
    %c0_5 = arith.constant 0 : index
    %2 = vector.load %arg2[%c0_3, %c0_4, %c0_5] : memref<1x4x256xf32, #tpu.memory_space<vmem>>, vector<1x4x256xf32>
    %3 = vector.shape_cast %2 : vector<1x4x256xf32> to vector<4x256xf32>
    %4 = vector.extract_strided_slice %0 {offsets = [0, 0], sizes = [8, 1], strides = [1, 1]} : vector<8x4xf32> to vector<8x1xf32>
    %5 = vector.extract_strided_slice %3 {offsets = [0, 0], sizes = [1, 256], strides = [1, 1]} : vector<4x256xf32> to vector<1x256xf32>
    %6 = vector.broadcast %4 : vector<8x1xf32> to vector<8x256xf32>
    %7 = vector.broadcast %5 : vector<1x256xf32> to vector<8x256xf32>
    %8 = arith.mulf %6, %7 : vector<8x256xf32>
    %9 = vector.broadcast %1 : vector<8x1xf32> to vector<8x256xf32>
    %10 = arith.addf %9, %8 : vector<8x256xf32>
    %11 = vector.extract_strided_slice %0 {offsets = [0, 1], sizes = [8, 1], strides = [1, 1]} : vector<8x4xf32> to vector<8x1xf32>
    %12 = vector.extract_strided_slice %3 {offsets = [1, 0], sizes = [1, 256], strides = [1, 1]} : vector<4x256xf32> to vector<1x256xf32>
    %13 = vector.broadcast %11 : vector<8x1xf32> to vector<8x256xf32>
    %14 = vector.broadcast %12 : vector<1x256xf32> to vector<8x256xf32>
    %15 = arith.mulf %13, %14 : vector<8x256xf32>
    %16 = arith.addf %10, %15 : vector<8x256xf32>
    %17 = vector.extract_strided_slice %0 {offsets = [0, 2], sizes = [8, 1], strides = [1, 1]} : vector<8x4xf32> to vector<8x1xf32>
    %18 = vector.extract_strided_slice %3 {offsets = [2, 0], sizes = [1, 256], strides = [1, 1]} : vector<4x256xf32> to vector<1x256xf32>
    %19 = vector.broadcast %17 : vector<8x1xf32> to vector<8x256xf32>
    %20 = vector.broadcast %18 : vector<1x256xf32> to vector<8x256xf32>
    %21 = arith.mulf %19, %20 : vector<8x256xf32>
    %22 = arith.addf %16, %21 : vector<8x256xf32>
    %23 = vector.extract_strided_slice %0 {offsets = [0, 3], sizes = [8, 1], strides = [1, 1]} : vector<8x4xf32> to vector<8x1xf32>
    %24 = vector.extract_strided_slice %3 {offsets = [3, 0], sizes = [1, 256], strides = [1, 1]} : vector<4x256xf32> to vector<1x256xf32>
    %25 = vector.broadcast %23 : vector<8x1xf32> to vector<8x256xf32>
    %26 = vector.broadcast %24 : vector<1x256xf32> to vector<8x256xf32>
    %27 = arith.mulf %25, %26 : vector<8x256xf32>
    %28 = arith.addf %22, %27 : vector<8x256xf32>
    %c0_6 = arith.constant 0 : index
    %c0_7 = arith.constant 0 : index
    %c0_8 = arith.constant 0 : index
    %29 = vector.load %arg5[%c0_6, %c0_7, %c0_8] : memref<1x8x256xf32, #tpu.memory_space<vmem>>, vector<1x8x256xf32>
    %30 = vector.shape_cast %29 : vector<1x8x256xf32> to vector<8x256xf32>
    %31 = arith.addf %28, %30 : vector<8x256xf32>
    %cst = arith.constant 0.000000e+00 : f32
    %32 = vector.broadcast %cst : f32 to vector<8x256xf32>
    %33 = arith.maximumf %31, %32 : vector<8x256xf32>
    %c0_9 = arith.constant 0 : index
    %c0_10 = arith.constant 0 : index
    %c0_11 = arith.constant 0 : index
    %34 = vector.load %arg6[%c0_9, %c0_10, %c0_11] : memref<1x8x256xf32, #tpu.memory_space<vmem>>, vector<1x8x256xf32>
    %35 = vector.shape_cast %34 : vector<1x8x256xf32> to vector<8x256xf32>
    %36 = vector.shape_cast %33 : vector<8x256xf32> to vector<1x8x256xf32>
    tpu.vector_store %arg6[%c0_9, %c0_10, %c0_11], %36 {strides = array<i32>} : memref<1x8x256xf32, #tpu.memory_space<vmem>>, vector<1x8x256xf32>,
    return
  }
  func.func @transform_0(%arg0: i32, %arg1: i32) -> (i32, i32, i32) {
    %c0_i32 = arith.constant 0 : i32
    %c0_i32_0 = arith.constant 0 : i32
    return %arg0, %c0_i32, %arg1 : i32, i32, i32
  }
  func.func @transform_1(%arg0: i32, %arg1: i32) -> (i32, i32) {
    %c0_i32 = arith.constant 0 : i32
    %c0_i32_0 = arith.constant 0 : i32
    %c0_i32_1 = arith.constant 0 : i32
    return %c0_i32, %c0_i32_0 : i32, i32
  }
  func.func @transform_2(%arg0: i32, %arg1: i32) -> (i32, i32) {
    %c0_i32 = arith.constant 0 : i32
    %c0_i32_0 = arith.constant 0 : i32
    %c0_i32_1 = arith.constant 0 : i32
    return %c0_i32, %c0_i32_0 : i32, i32
  }
  func.func @transform_3(%arg0: i32, %arg1: i32) -> (i32, i32, i32) {
    %c0_i32 = arith.constant 0 : i32
    %c0_i32_0 = arith.constant 0 : i32
    return %arg0, %c0_i32, %arg1 : i32, i32, i32
  }
  func.func @transform_4(%arg0: i32, %arg1: i32) -> (i32, i32, i32) {
    %c0_i32 = arith.constant 0 : i32
    %c0_i32_0 = arith.constant 0 : i32
    return %arg0, %c0_i32, %arg1 : i32, i32, i32
  }
}

</mosaic_0001>

<llo_original>
// kernel: _unnamed_function_.1
$region0: #{_unnamed_function_.1}
  #allocation0 [shape = 'u32[]', space=smem, size = 0x4, offset = 0x4, fixed_abs, tag = 'smem constant byte address 0x4 - core index']
  #allocation1 [shape = 'u32[144,128]{1,0:T(1,128)}', space=vmem, size = 0x12000, scoped, tag = 'internal scratch']
  %s0 = inlined_call_operand.vmem [shape: f32[2,4,256], index: 0, kind: input, shape index: {}]
  %s1 = inlined_call_operand.vmem [shape: f32[8,4], index: 1, kind: input, shape index: {}]
  %s2 = inlined_call_operand.vmem [shape: f32[8,1], index: 2, kind: input, shape index: {}]
  %s3 = inlined_call_operand.vmem [shape: f32[2,8,256], index: 3, kind: input, shape index: {}]
  %s4 = inlined_call_operand.vmem [shape: f32[2,8,256], index: 4, kind: output, shape index: {}]
  %s5 = sld [smem:[#allocation0]]
  $region49: #{_unnamed_function_.1} parent=0
    _
  %s7 = ssub.s32 1, %s5
  %s8 = scalar_select 0, %s7, %s5
  loop: start=0, step=1, limit=4
  $region2: #{_unnamed_function_.1} parent=0 // loop_pre_header
    _
  $region3: #{_unnamed_function_.1} parent=0 // loop_header
    %s10 = sphi 0, %s14
    %p11 = scmp.ge.s32.totalorder %s10, 4
    %s17 = sphi 0, %s29
    %s18 = sphi 0, %s25
    %s19 = sphi 0, %s17
    %s20 = sphi 0, %s18
    %s21 = sphi 0, %s19
    %s22 = sphi 0, %s20
    %s34 = sphi 0, %s36
    %s37 = sphi 0, %s34
    %s38 = sphi 0, %s37
    %s54 = sphi 0, %s38
    %s58 = sphi 0, %s58
    %s60 = sphi 0, %s58
    %s61 = sphi 0, %s60
    %s75 = sphi 0, %s61
    %s79 = sphi 0, %s79
    %s81 = sphi 0, %s79
    %s82 = sphi 0, %s81
    %s96 = sphi 0, %s82
    %s104 = sphi 0, %s106
    %s107 = sphi 0, %s104
    %s108 = sphi 0, %s107
    %s124 = sphi 0, %s108
    %s132 = sphi 0, %s134
    %s135 = sphi 0, %s132
    %s136 = sphi 0, %s135
    %s152 = sphi 0, %s136
  $region4: #{_unnamed_function_.1} parent=0 // loop_header_branch
    %13 = sbr.rel (%p11) target = $region8
  $region5: #{_unnamed_function_.1} parent=0 // loop_body
    %s15 = ssub.s32 %s10, 1
    %s16 = ssub.s32 %s10, 2
    %s23 = sadd.s32 1, %s18
    %p24 = scmp.ge.s32.totalorder %s23, 1
    %s25 = scalar_select %p24, 0, %s23
    %s26 = sadd.s32 1, %s17
    %s27 = scalar_select %p24, %s26, %s17
    %p28 = scmp.ge.s32.totalorder %s27, 2
    %s29 = scalar_select %p28, 0, %s27
    %s30 = ssub.s32 %s17, %s29
    %s31 = ssub.s32 %s18, %s25
    %s32 = sor.u32 %s30, %s31
    %p33 = scmp.eq.s32.totalorder %s32, 0
    %s35 = sadd.s32 %s34, 1
    %s36 = scalar_select %p33, %s34, %s35
    %p39 = pneg %p33
    %p40 = scmp.eq.s32.totalorder %s10, 1
    %p41 = por %p39, %p40
    %p42 = scmp.ne.s32.totalorder %s34, %s37
    %p43 = scmp.eq.s32.totalorder %s10, 0
    %p44 = por %p42, %p43
    %p45 = scmp.ne.s32.totalorder %s34, %s37
    %p46 = scmp.eq.s32.totalorder %s15, 1
    %p47 = por %p45, %p46
    %p48 = scmp.ne.s32.totalorder %s37, %s38
    %p49 = scmp.eq.s32.totalorder %s15, 0
    %p50 = por %p48, %p49
    %p51 = scmp.ne.s32.totalorder %s37, %s38
    %p52 = scmp.eq.s32.totalorder %s16, 1
    %p53 = por %p51, %p52
    %p55 = scmp.ne.s32.totalorder %s38, %s54
    %p56 = scmp.eq.s32.totalorder %s16, 0
    %p57 = por %p55, %p56
    %s59 = sadd.s32 %s58, 1
    %p62 = scmp.eq.s32.totalorder %s10, 1
    %p63 = scmp.ne.s32.totalorder %s58, %s60
    %p64 = scmp.eq.s32.totalorder %s10, 0
    %p65 = por %p63, %p64
    %p66 = scmp.ne.s32.totalorder %s58, %s60
    %p67 = scmp.eq.s32.totalorder %s15, 1
    %p68 = por %p66, %p67
    %p69 = scmp.ne.s32.totalorder %s60, %s61
    %p70 = scmp.eq.s32.totalorder %s15, 0
    %p71 = por %p69, %p70
    %p72 = scmp.ne.s32.totalorder %s60, %s61
    %p73 = scmp.eq.s32.totalorder %s16, 1
    %p74 = por %p72, %p73
    %p76 = scmp.ne.s32.totalorder %s61, %s75
    %p77 = scmp.eq.s32.totalorder %s16, 0
    %p78 = por %p76, %p77
    %s80 = sadd.s32 %s79, 1
    %p83 = scmp.eq.s32.totalorder %s10, 1
    %p84 = scmp.ne.s32.totalorder %s79, %s81
    %p85 = scmp.eq.s32.totalorder %s10, 0
    %p86 = por %p84, %p85
    %p87 = scmp.ne.s32.totalorder %s79, %s81
    %p88 = scmp.eq.s32.totalorder %s15, 1
    %p89 = por %p87, %p88
    %p90 = scmp.ne.s32.totalorder %s81, %s82
    %p91 = scmp.eq.s32.totalorder %s15, 0
    %p92 = por %p90, %p91
    %p93 = scmp.ne.s32.totalorder %s81, %s82
    %p94 = scmp.eq.s32.totalorder %s16, 1
    %p95 = por %p93, %p94
    %p97 = scmp.ne.s32.totalorder %s82, %s96
    %p98 = scmp.eq.s32.totalorder %s16, 0
    %p99 = por %p97, %p98
    %s100 = ssub.s32 %s17, %s29
    %s101 = ssub.s32 %s18, %s25
    %s102 = sor.u32 %s100, %s101
    %p103 = scmp.eq.s32.totalorder %s102, 0
    %s105 = sadd.s32 %s104, 1
    %s106 = scalar_select %p103, %s104, %s105
    %p109 = pneg %p103
    %p110 = scmp.eq.s32.totalorder %s10, 1
    %p111 = por %p109, %p110
    %p112 = scmp.ne.s32.totalorder %s104, %s107
    %p113 = scmp.eq.s32.totalorder %s10, 0
    %p114 = por %p112, %p113
    %p115 = scmp.ne.s32.totalorder %s104, %s107
    %p116 = scmp.eq.s32.totalorder %s15, 1
    %p117 = por %p115, %p116
    %p118 = scmp.ne.s32.totalorder %s107, %s108
    %p119 = scmp.eq.s32.totalorder %s15, 0
    %p120 = por %p118, %p119
    %p121 = scmp.ne.s32.totalorder %s107, %s108
    %p122 = scmp.eq.s32.totalorder %s16, 1
    %p123 = por %p121, %p122
    %p125 = scmp.ne.s32.totalorder %s108, %s124
    %p126 = scmp.eq.s32.totalorder %s16, 0
    %p127 = por %p125, %p126
    %s128 = ssub.s32 %s17, %s29
    %s129 = ssub.s32 %s18, %s25
    %s130 = sor.u32 %s128, %s129
    %p131 = scmp.eq.s32.totalorder %s130, 0
    %s133 = sadd.s32 %s132, 1
    %s134 = scalar_select %p131, %s132, %s133
    %p137 = pneg %p131
    %p138 = scmp.eq.s32.totalorder %s10, 1
    %p139 = por %p137, %p138
    %p140 = scmp.ne.s32.totalorder %s132, %s135
    %p141 = scmp.eq.s32.totalorder %s10, 0
    %p142 = por %p140, %p141
    %p143 = scmp.ne.s32.totalorder %s132, %s135
    %p144 = scmp.eq.s32.totalorder %s15, 1
    %p145 = por %p143, %p144
    %p146 = scmp.ne.s32.totalorder %s135, %s136
    %p147 = scmp.eq.s32.totalorder %s15, 0
    %p148 = por %p146, %p147
    %p149 = scmp.ne.s32.totalorder %s135, %s136
    %p150 = scmp.eq.s32.totalorder %s16, 1
    %p151 = por %p149, %p150
    %p153 = scmp.ne.s32.totalorder %s136, %s152
    %p154 = scmp.eq.s32.totalorder %s16, 0
    %p155 = por %p153, %p154
    %p156 = scmp.le.s32.totalorder 1, %s10
    %p157 = scmp.lt.s32.totalorder %s10, 3
    %p158 = pnand %p156, %p157
    %p159 = pneg %p158
    // Predicated region
    $region9: #{_unnamed_function_.1} parent=5 // pred_check
      _
    $region10: #{_unnamed_function_.1} parent=5 // pred_check_branch
      %161 = sbr.rel (%p158) target = $region12
    $region11: #{_unnamed_function_.1} parent=5 // pred_region
      %s162 = ssub.s32 %s10, 1
      // Predicated region
      $region13: #{_unnamed_function_.1} parent=11 // pred_check
        %p163 = pneg %p71
      $region14: #{_unnamed_function_.1} parent=11 // pred_check_branch
        %165 = sbr.rel (%p163) target = $region16
      $region15: #{_unnamed_function_.1} parent=11 // pred_region
        _
      $region16: #{_unnamed_function_.1} parent=11 // pred_fallthru
        _
      // Predicated region
      $region17: #{_unnamed_function_.1} parent=11 // pred_check
        %p166 = pneg %p92
      $region18: #{_unnamed_function_.1} parent=11 // pred_check_branch
        %168 = sbr.rel (%p166) target = $region20
      $region19: #{_unnamed_function_.1} parent=11 // pred_region
        _
      $region20: #{_unnamed_function_.1} parent=11 // pred_fallthru
        _
    $region12: #{_unnamed_function_.1} parent=5 // pred_fallthru
      _
    %p169 = scmp.lt.s32.totalorder %s10, 2
    // Predicated region
    $region21: #{_unnamed_function_.1} parent=5 // pred_check
      %p170 = pneg %p169
    $region22: #{_unnamed_function_.1} parent=5 // pred_check_branch
      %172 = sbr.rel (%p170) target = $region24
    $region23: #{_unnamed_function_.1} parent=5 // pred_region
      // Predicated region
      $region25: #{_unnamed_function_.1} parent=23 // pred_check
        %p173 = pneg %p44
      $region26: #{_unnamed_function_.1} parent=23 // pred_check_branch
        %175 = sbr.rel (%p173) target = $region28
      $region27: #{_unnamed_function_.1} parent=23 // pred_region
        %s176 = smul.u32 2, %s18
        %p177 = scmp.lt.s32.totalorder %s17, 1
        %s178 = scalar_select %p177, %s17, 1
        %p179 = scmp.lt.s32.totalorder %s176, 1
        %s180 = scalar_select %p179, %s176, 1
        %s181 = smul.addr %s178, 2
        %s182 = sadd.s32 %s180, %s181
        %s183 = smul.addr %s182, 4
        %s184 = scalar_lea.vmem %s0, %s183
        %s185 = smul.u32 2, %s18
      $region28: #{_unnamed_function_.1} parent=23 // pred_fallthru
        _
      // Predicated region
      $region29: #{_unnamed_function_.1} parent=23 // pred_check
        %p186 = pneg %p114
      $region30: #{_unnamed_function_.1} parent=23 // pred_check_branch
        %188 = sbr.rel (%p186) target = $region32
      $region31: #{_unnamed_function_.1} parent=23 // pred_region
        %s189 = smul.u32 2, %s18
        %p190 = scmp.lt.s32.totalorder %s17, 1
        %s191 = scalar_select %p190, %s17, 1
        %p192 = scmp.lt.s32.totalorder %s189, 1
        %s193 = scalar_select %p192, %s189, 1
        %s194 = smul.addr %s191, 2
        %s195 = sadd.s32 %s193, %s194
        %s196 = smul.addr %s195, 8
        %s197 = scalar_lea.vmem %s3, %s196
        %s198 = smul.u32 2, %s18
      $region32: #{_unnamed_function_.1} parent=23 // pred_fallthru
        _
    $region24: #{_unnamed_function_.1} parent=5 // pred_fallthru
      _
    %p199 = scmp.le.s32.totalorder 1, %s10
    %p200 = scmp.lt.s32.totalorder %s10, 3
    %p201 = pnand %p199, %p200
    %p202 = pneg %p201
    // Predicated region
    $region33: #{_unnamed_function_.1} parent=5 // pred_check
      _
    $region34: #{_unnamed_function_.1} parent=5 // pred_check_branch
      %204 = sbr.rel (%p201) target = $region36
    $region35: #{_unnamed_function_.1} parent=5 // pred_region
      %s205 = ssub.s32 %s10, 1
      %s206 = smul.u32 2, %s20
      %p207 = scmp.lt.s32.totalorder %s19, 1
      %s208 = scalar_select %p207, %s19, 1
      %p209 = scmp.lt.s32.totalorder %s206, 1
      %s210 = scalar_select %p209, %s206, 1
      %s211 = smul.addr %s208, 2
      %s212 = sadd.s32 %s210, %s211
      %s213 = smul.addr %s212, 4
      %s214 = scalar_lea.vmem %s0, %s213
      %p215 = pneg %p50
      %p216 = pneg %p47
      %p217 = pneg %p71
      %p218 = pneg %p68
      %p219 = pneg %p92
      %p220 = pneg %p89
      %s221 = smul.u32 2, %s20
      %p222 = scmp.lt.s32.totalorder %s19, 1
      %s223 = scalar_select %p222, %s19, 1
      %p224 = scmp.lt.s32.totalorder %s221, 1
      %s225 = scalar_select %p224, %s221, 1
      %s226 = smul.addr %s223, 2
      %s227 = sadd.s32 %s225, %s226
      %s228 = smul.addr %s227, 8
      %s229 = scalar_lea.vmem %s3, %s228
      %p230 = pneg %p120
      %p231 = pneg %p117
      %p232 = pneg %p148
      %p233 = pneg %p145
      %s234 = smul.u32 2, %s20
      %p235 = scmp.lt.s32.totalorder %s19, 1
      %s236 = scalar_select %p235, %s19, 1
      %p237 = scmp.lt.s32.totalorder %s234, 1
      %s238 = scalar_select %p237, %s234, 1
      %s239 = smul.addr %s236, 2
      %s240 = sadd.s32 %s238, %s239
      %s241 = smul.addr %s240, 8
      %s242 = scalar_lea.vmem %s4, %s241
      %s243 = smul.u32 2, %s20
      %p244 = scmp.lt.s32.totalorder %s19, 1
      %s245 = scalar_select %p244, %s19, 1
      %p246 = scmp.lt.s32.totalorder %s243, 1
      %s247 = scalar_select %p246, %s243, 1
      %s248 = smul.addr %s245, 2
      %s249 = sadd.s32 %s247, %s248
      %s250 = smul.addr %s249, 4
      %s251 = scalar_lea.vmem %s0, %s250
      %s252 = smul.u32 2, %s20
      %s253 = smul.u32 2, %s20
      %p254 = scmp.lt.s32.totalorder %s19, 1
      %s255 = scalar_select %p254, %s19, 1
      %p256 = scmp.lt.s32.totalorder %s253, 1
      %s257 = scalar_select %p256, %s253, 1
      %s258 = smul.addr %s255, 2
      %s259 = sadd.s32 %s257, %s258
      %s260 = smul.addr %s259, 8
      %s261 = scalar_lea.vmem %s3, %s260
      %s262 = smul.u32 2, %s20
      %s263 = smul.u32 2, %s20
      %p264 = scmp.lt.s32.totalorder %s19, 1
      %s265 = scalar_select %p264, %s19, 1
      %p266 = scmp.lt.s32.totalorder %s263, 1
      %s267 = scalar_select %p266, %s263, 1
      %s268 = smul.addr %s265, 2
      %s269 = sadd.s32 %s267, %s268
      %s270 = smul.addr %s269, 8
      %s271 = scalar_lea.vmem %s4, %s270
      %s272 = smul.u32 2, %s20
      %v273 = vld [vmem:[%s1] sm:$0xff]
      %v274 = vld [vmem:[%s2] sm:$0xff]
      %v275 = vld [vmem:[%s251] sm:$0xff]
      %277 = vset.pattern.permute.xlu0 0
      %278 = vperm.xlu0 %277, %v273
      %v279 = vpop.permute.xlu0 %278
      %v282 = vlaneseq
      %v283 = vshrl.u32 %v282, 7
      %v284 = vsub.s32 0, %v283
      %v285 = vrot.slane %v275, %v284
      %v286 = vlaneseq
      %v287 = vshrl.u32 %v286, 7
      %v288 = vsub.s32 4, %v287
      %v289 = vrot.slane %v275, %v288
      %v292 = vlaneseq
      %v293 = vshrl.u32 %v292, 7
      %v294 = vsub.s32 0, %v293
      %v295 = vrot.slane %v285, %v294
      %v296 = vlaneseq
      %v297 = vshrl.u32 %v296, 7
      %v298 = vsub.s32 0, %v297
      %v299 = vrot.slane %v289, %v298
      %v300 = vmul.f32 %v279, %v295
      %v301 = vmul.f32 %v279, %v299
      %303 = vset.pattern.permute.xlu0 0
      %304 = vperm.xlu0 %303, %v274
      %v305 = vpop.permute.xlu0 %304
      %v307 = vadd.f32 %v305, %v300
      %v308 = vadd.f32 %v305, %v301
      %309 = vset.pattern.permute.xlu0 1
      %310 = vperm.xlu0 %309, %v273
      %v311 = vpop.permute.xlu0 %310
      %v313 = vlaneseq
      %v314 = vshrl.u32 %v313, 7
      %v315 = vsub.s32 1, %v314
      %v316 = vrot.slane %v275, %v315
      %v317 = vlaneseq
      %v318 = vshrl.u32 %v317, 7
      %v319 = vsub.s32 5, %v318
      %v320 = vrot.slane %v275, %v319
      %v323 = vlaneseq
      %v324 = vshrl.u32 %v323, 7
      %v325 = vsub.s32 1, %v324
      %v326 = vrot.slane %v316, %v325
      %v327 = vlaneseq
      %v328 = vshrl.u32 %v327, 7
      %v329 = vsub.s32 1, %v328
      %v330 = vrot.slane %v320, %v329
      %v331 = vmul.f32 %v311, %v326
      %v332 = vmul.f32 %v311, %v330
      %v333 = vadd.f32 %v307, %v331
      %v334 = vadd.f32 %v308, %v332
      %335 = vset.pattern.permute.xlu0 2
      %336 = vperm.xlu0 %335, %v273
      %v337 = vpop.permute.xlu0 %336
      %v339 = vlaneseq
      %v340 = vshrl.u32 %v339, 7
      %v341 = vsub.s32 2, %v340
      %v342 = vrot.slane %v275, %v341
      %v343 = vlaneseq
      %v344 = vshrl.u32 %v343, 7
      %v345 = vsub.s32 6, %v344
      %v346 = vrot.slane %v275, %v345
      %v349 = vlaneseq
      %v350 = vshrl.u32 %v349, 7
      %v351 = vsub.s32 2, %v350
      %v352 = vrot.slane %v342, %v351
      %v353 = vlaneseq
      %v354 = vshrl.u32 %v353, 7
      %v355 = vsub.s32 2, %v354
      %v356 = vrot.slane %v346, %v355
      %v357 = vmul.f32 %v337, %v352
      %v358 = vmul.f32 %v337, %v356
      %v359 = vadd.f32 %v333, %v357
      %v360 = vadd.f32 %v334, %v358
      %361 = vset.pattern.permute.xlu0 3
      %362 = vperm.xlu0 %361, %v273
      %v363 = vpop.permute.xlu0 %362
      %v365 = vlaneseq
      %v366 = vshrl.u32 %v365, 7
      %v367 = vsub.s32 3, %v366
      %v368 = vrot.slane %v275, %v367
      %v369 = vlaneseq
      %v370 = vshrl.u32 %v369, 7
      %v371 = vsub.s32 7, %v370
      %v372 = vrot.slane %v275, %v371
      %v375 = vlaneseq
      %v376 = vshrl.u32 %v375, 7
      %v377 = vsub.s32 3, %v376
      %v378 = vrot.slane %v368, %v377
      %v379 = vlaneseq
      %v380 = vshrl.u32 %v379, 7
      %v381 = vsub.s32 3, %v380
      %v382 = vrot.slane %v372, %v381
      %v383 = vmul.f32 %v363, %v378
      %v384 = vmul.f32 %v363, %v382
      %v385 = vadd.f32 %v359, %v383
      %v386 = vadd.f32 %v360, %v384
      %v387 = vld [vmem:[%s261] sm:$0xff]
      %v388 = vld [vmem:[%s261 + $0x8] sm:$0xff]
      %v389 = vadd.f32 %v385, %v387
      %v390 = vadd.f32 %v386, %v388
      %v391 = vmax.f32 %v389, 0.0
      %v392 = vmax.f32 %v390, 0.0
      %393 = vst [vmem:[%s271] sm:$0xff] %v391
      %394 = vst [vmem:[%s271 + $0x8] sm:$0xff] %v392
      %s395 = smul.u32 2, %s20
      %p396 = scmp.lt.s32.totalorder %s19, 1
      %s397 = scalar_select %p396, %s19, 1
      %p398 = scmp.lt.s32.totalorder %s395, 1
      %s399 = scalar_select %p398, %s395, 1
      %s400 = smul.addr %s397, 2
      %s401 = sadd.s32 %s399, %s400
      %s402 = smul.addr %s401, 8
      %s403 = scalar_lea.vmem %s4, %s402
      // Predicated region
      $region37: #{_unnamed_function_.1} parent=35 // pred_check
        %p404 = pneg %p145
      $region38: #{_unnamed_function_.1} parent=35 // pred_check_branch
        %406 = sbr.rel (%p404) target = $region40
      $region39: #{_unnamed_function_.1} parent=35 // pred_region
        %s407 = smul.u32 2, %s20
      $region40: #{_unnamed_function_.1} parent=35 // pred_fallthru
        _
    $region36: #{_unnamed_function_.1} parent=5 // pred_fallthru
      _
    %p408 = scmp.le.s32.totalorder 2, %s10
    // Predicated region
    $region41: #{_unnamed_function_.1} parent=5 // pred_check
      %p409 = pneg %p408
    $region42: #{_unnamed_function_.1} parent=5 // pred_check_branch
      %411 = sbr.rel (%p409) target = $region44
    $region43: #{_unnamed_function_.1} parent=5 // pred_region
      %s412 = ssub.s32 %s10, 2
      // Predicated region
      $region45: #{_unnamed_function_.1} parent=43 // pred_check
        %p413 = pneg %p151
      $region46: #{_unnamed_function_.1} parent=43 // pred_check_branch
        %415 = sbr.rel (%p413) target = $region48
      $region47: #{_unnamed_function_.1} parent=43 // pred_region
        %s416 = smul.u32 2, %s22
        %p417 = scmp.lt.s32.totalorder %s21, 1
        %s418 = scalar_select %p417, %s21, 1
        %p419 = scmp.lt.s32.totalorder %s416, 1
        %s420 = scalar_select %p419, %s416, 1
        %s421 = smul.addr %s418, 2
        %s422 = sadd.s32 %s420, %s421
        %s423 = smul.addr %s422, 8
        %s424 = scalar_lea.vmem %s4, %s423
      $region48: #{_unnamed_function_.1} parent=43 // pred_fallthru
        _
    $region44: #{_unnamed_function_.1} parent=5 // pred_fallthru
      _
  $region6: #{_unnamed_function_.1} parent=0 // loop_footer
    %s14 = sadd.s32 1, %s10
  $region7: #{_unnamed_function_.1} parent=0 // loop_footer_branch
    %9 = sbr.rel target = $region3
  $region8: #{_unnamed_function_.1} parent=0 // loop_exit
    _

</llo_original>
